<compile_context>
chip_gen: v6e
topology: v6e:2x2x1
jax: 0.10.0
libtpu: 0.0.40
codegen_flags: <defaults>
</compile_context>

<pallas_src>
import math

import jax
import jax.numpy as jnp
from jax.experimental import pallas as pl
from jax.experimental.pallas import tpu as pltpu

# -------------------- model hyperparameters (small, TPU-friendly) -----------
LATENT_DIM = 16
QUANTIZERS = 8
INPUT_DIM = QUANTIZERS * LATENT_DIM          # 128
HIDDEN_DIMS = [64, 32]
CONDITION_DIM = 2
BATCH = 8
REP = 8                                      # sublane replication of bias/cond rows
BN_EPS = 1e-5
LEAK = 0.2
H0, H1 = HIDDEN_DIMS
SLAB_LANES = 2 * INPUT_DIM                   # 256


# ---------------- packed weight-slab layout (all offsets sublane-aligned) ---
E0_ROW = 0                                   # e0_w   (128, 64)
E1_ROW = E0_ROW + INPUT_DIM                  # 128    e1_w   (64, 32)
D0Z_ROW = E1_ROW + H0                        # 192    d0_wz  (128, 32)
D0C_ROW = D0Z_ROW + INPUT_DIM                # 320    2 cond rows, each x REP -> 16 rows
D1_ROW = D0C_ROW + 2 * REP                   # 336    d1_w   (32, 64)
DO_ROW = D1_ROW + H1                         # 368    do_w   (64, 128)
HEAD_ROW = DO_ROW + H0                       # 432    head_w (32, 256)  [mu | var]
BIAS_ROW = HEAD_ROW + H1                     # 464    6 bias blocks x REP rows
W_ROWS = BIAS_ROW + 6 * REP                  # 512

# bias block indices (relative to BIAS_ROW, each block is REP replicated rows)
B_E0, B_E1, B_HEAD, B_D0, B_D1, B_DO = range(6)


# ------------------------------ Pallas kernel -------------------------------
def vae_fwd_kernel(in_ref, w_ref, out_ref):
    b = in_ref.shape[0]

    def lrelu(h):
        # LeakyReLU(0.2): for 0 < slope < 1, max(h, slope*h) is exact
        return jnp.maximum(h, LEAK * h)

    def bias(idx, width):
        # (b, width) pre-replicated rows: plain elementwise add, no broadcast
        r = BIAS_ROW + idx * REP
        return w_ref[r:r + b, 0:width]

    # packed input: [ x | eps | cond(padded) ] — lane-aligned free views
    x = in_ref[:, 0:INPUT_DIM]
    eps = in_ref[:, INPUT_DIM:2 * INPUT_DIM]

    # ---- encoder: [Linear (+folded BN) -> LeakyReLU -> Dropout(id)] x2
    h = lrelu(jnp.dot(x, w_ref[E0_ROW:E0_ROW + INPUT_DIM, 0:H0],
                      preferred_element_type=jnp.float32) + bias(B_E0, H0))
    h = lrelu(jnp.dot(h, w_ref[E1_ROW:E1_ROW + H0, 0:H1],
                      preferred_element_type=jnp.float32) + bias(B_E1, H1))

    # ---- fused mu|logvar head: one (B,32)@(32,256) matmul + one 256-wide bias
    head = jnp.dot(h, w_ref[HEAD_ROW:HEAD_ROW + H1, :],
                   preferred_element_type=jnp.float32) + bias(B_HEAD, 2 * INPUT_DIM)
    mu = head[:, 0:INPUT_DIM]
    logvar = head[:, INPUT_DIM:2 * INPUT_DIM]

    # ---- reparameterize: z = mu + eps * exp(0.5 * logvar)
    z = mu + eps * jnp.exp(0.5 * logvar)

    # ---- decoder layer 0: concat([z, cond]) @ W  ==  z @ Wz  +  cond FMAs
    # (the K=2 condition contraction stays on the VPU; cond weight rows are
    #  pre-replicated x REP so no sublane broadcast is needed)
    h = jnp.dot(z, w_ref[D0Z_ROW:D0Z_ROW + INPUT_DIM, 0:H1],
                preferred_element_type=jnp.float32)
    c0 = in_ref[:, 2 * INPUT_DIM:2 * INPUT_DIM + 1]
    c1 = in_ref[:, 2 * INPUT_DIM + 1:2 * INPUT_DIM + 2]
    h = h + c0 * w_ref[D0C_ROW:D0C_ROW + b, 0:H1]
    h = h + c1 * w_ref[D0C_ROW + REP:D0C_ROW + REP + b, 0:H1]
    h = lrelu(h + bias(B_D0, H1))

    # ---- decoder layer 1
    h = lrelu(jnp.dot(h, w_ref[D1_ROW:D1_ROW + H1, 0:H0],
                      preferred_element_type=jnp.float32) + bias(B_D1, H0))

    # ---- decoder output: Linear -> tanh
    out = jnp.tanh(jnp.dot(h, w_ref[DO_ROW:DO_ROW + H0, 0:INPUT_DIM],
                           preferred_element_type=jnp.float32)
                   + bias(B_DO, INPUT_DIM))

    # ---- packed output [recon | mu | logvar]: one lane-dense (B, 384) store
    out_ref[:, 0:INPUT_DIM] = out
    out_ref[:, INPUT_DIM:2 * INPUT_DIM] = mu
    out_ref[:, 2 * INPUT_DIM:3 * INPUT_DIM] = logvar


# -------------------------- parameter construction --------------------------
def linear_params(key, fan_in, fan_out):
    """PyTorch nn.Linear default init: U(-1/sqrt(fan_in), 1/sqrt(fan_in))."""
    kw, kb = jax.random.split(key)
    bound = 1.0 / math.sqrt(fan_in)
    w = jax.random.uniform(kw, (fan_in, fan_out), jnp.float32, -bound, bound)
    b = jax.random.uniform(kb, (fan_out,), jnp.float32, -bound, bound)
    return w, b


def bn_params(key, dim):
    """Non-trivial eval-mode BatchNorm1d state (as after some training)."""
    k1, k2, k3, k4 = jax.random.split(key, 4)
    return dict(
        gamma=jax.random.uniform(k1, (dim,), jnp.float32, 0.5, 1.5),
        beta=0.1 * jax.random.normal(k2, (dim,), jnp.float32),
        mean=0.1 * jax.random.normal(k3, (dim,), jnp.float32),
        var=jax.random.uniform(k4, (dim,), jnp.float32, 0.5, 1.5),
    )


def fold_bn(w, b, bn):
    """Fold eval-mode BN (running stats) into the preceding Linear."""
    scale = bn["gamma"] / jnp.sqrt(bn["var"] + BN_EPS)
    shift = bn["beta"] - bn["mean"] * scale
    return w * scale[None, :], b * scale + shift


def build_raw_params(key):
    ks = jax.random.split(key, 11)
    p = {}
    p["e0_w"], p["e0_b"] = linear_params(ks[0], INPUT_DIM, H0)
    p["e0_bn"] = bn_params(ks[1], H0)
    p["e1_w"], p["e1_b"] = linear_params(ks[2], H0, H1)
    p["e1_bn"] = bn_params(ks[3], H1)
    p["mu_w"], p["mu_b"] = linear_params(ks[4], H1, INPUT_DIM)
    p["var_w"], p["var_b"] = linear_params(ks[5], H1, INPUT_DIM)
    p["d0_w"], p["d0_b"] = linear_params(ks[6], INPUT_DIM + CONDITION_DIM, H1)
    p["d0_bn"] = bn_params(ks[7], H1)
    p["d1_w"], p["d1_b"] = linear_params(ks[8], H1, H0)
    p["d1_bn"] = bn_params(ks[9], H0)
    p["do_w"], p["do_b"] = linear_params(ks[10], H0, INPUT_DIM)
    return p


def pack_params(p):
    """BN-fold + pack EVERYTHING into one (W_ROWS, 256) f32 slab."""
    e0_w, e0_b = fold_bn(p["e0_w"], p["e0_b"], p["e0_bn"])
    e1_w, e1_b = fold_bn(p["e1_w"], p["e1_b"], p["e1_bn"])
    d0_w, d0_b = fold_bn(p["d0_w"], p["d0_b"], p["d0_bn"])
    d1_w, d1_b = fold_bn(p["d1_w"], p["d1_b"], p["d1_bn"])
    d0_wz, d0_wc = d0_w[:INPUT_DIM, :], d0_w[INPUT_DIM:, :]

    slab = jnp.zeros((W_ROWS, SLAB_LANES), jnp.float32)

    def put_w(s, row, w):
        return s.at[row:row + w.shape[0], 0:w.shape[1]].set(w)

    def put_b(s, idx, b_vec):
        r = BIAS_ROW + idx * REP
        return s.at[r:r + REP, 0:b_vec.shape[0]].set(
            jnp.broadcast_to(b_vec[None, :], (REP, b_vec.shape[0])))

    slab = put_w(slab, E0_ROW, e0_w)
    slab = put_w(slab, E1_ROW, e1_w)
    slab = put_w(slab, D0Z_ROW, d0_wz)
    slab = put_w(slab, D1_ROW, d1_w)
    slab = put_w(slab, DO_ROW, p["do_w"])
    slab = put_w(slab, HEAD_ROW, jnp.concatenate([p["mu_w"], p["var_w"]], axis=1))

    # two condition-weight rows, each replicated x REP (no sublane bcast in kernel)
    slab = slab.at[D0C_ROW:D0C_ROW + REP, 0:H1].set(
        jnp.broadcast_to(d0_wc[0][None, :], (REP, H1)))
    slab = slab.at[D0C_ROW + REP:D0C_ROW + 2 * REP, 0:H1].set(
        jnp.broadcast_to(d0_wc[1][None, :], (REP, H1)))

    slab = put_b(slab, B_E0, e0_b)
    slab = put_b(slab, B_E1, e1_b)
    slab = put_b(slab, B_HEAD, jnp.concatenate([p["mu_b"], p["var_b"]], axis=0))
    slab = put_b(slab, B_D0, d0_b)
    slab = put_b(slab, B_D1, d1_b)
    slab = put_b(slab, B_DO, p["do_b"])
    return slab


# ------------------------------- wrapper -------------------------------------
def vae_forward(x, condition, eps, w_slab):
    b = x.shape[0]
    assert b <= REP, "bias rows are pre-replicated to REP sublanes"
    x_flat = x.reshape(b, -1).astype(jnp.float32)           # glue: view/flatten
    cond = condition.astype(jnp.float32)
    eps = eps.astype(jnp.float32)

    # pack [x | eps | cond(padded to 128)] -> one lane-dense (B, 384) input DMA
    cond_pad = jnp.pad(cond, ((0, 0), (0, INPUT_DIM - CONDITION_DIM)))
    packed_in = jnp.concatenate([x_flat, eps, cond_pad], axis=1)

    flops = 2 * b * (INPUT_DIM * H0 + H0 * H1 + H1 * 2 * INPUT_DIM
                     + INPUT_DIM * H1 + H1 * H0 + H0 * INPUT_DIM)
    bytes_accessed = 4 * (packed_in.size + w_slab.size + b * 3 * INPUT_DIM)

    vmem = pl.BlockSpec(memory_space=pltpu.MemorySpace.VMEM)
    packed = pl.pallas_call(
        vae_fwd_kernel,
        out_shape=jax.ShapeDtypeStruct((b, 3 * INPUT_DIM), jnp.float32),
        in_specs=[vmem, vmem],
        out_specs=vmem,
        compiler_params=pltpu.CompilerParams(vmem_limit_bytes=4 * 1024 * 1024),
        cost_estimate=pl.CostEstimate(flops=flops,
                                      transcendentals=2 * b * INPUT_DIM,
                                      bytes_accessed=bytes_accessed),
    )(packed_in, w_slab)

    x_recon = packed[:, 0:INPUT_DIM].reshape(b, QUANTIZERS, LATENT_DIM)  # glue
    mu = packed[:, INPUT_DIM:2 * INPUT_DIM]
    logvar = packed[:, 2 * INPUT_DIM:3 * INPUT_DIM]
    return x_recon, mu, logvar


# --------------------------- pure-JAX reference ------------------------------
def vae_forward_ref(x, condition, eps, p):
    """Unfolded, unpacked reference (explicit eval-mode BatchNorm)."""
    b = x.shape[0]
    h = x.reshape(b, -1).astype(jnp.float32)

    def lrelu(v):
        return jnp.where(v > 0, v, LEAK * v)

    def bn(v, s):
        return (v - s["mean"]) / jnp.sqrt(s["var"] + BN_EPS) * s["gamma"] + s["beta"]

    h = lrelu(bn(h @ p["e0_w"] + p["e0_b"], p["e0_bn"]))
    h = lrelu(bn(h @ p["e1_w"] + p["e1_b"], p["e1_bn"]))
    mu = h @ p["mu_w"] + p["mu_b"]
    logvar = h @ p["var_w"] + p["var_b"]
    z = mu + eps * jnp.exp(0.5 * logvar)
    zc = jnp.concatenate([z, condition.astype(jnp.float32)], axis=1)
    h = lrelu(bn(zc @ p["d0_w"] + p["d0_b"], p["d0_bn"]))
    h = lrelu(bn(h @ p["d1_w"] + p["d1_b"], p["d1_bn"]))
    out = jnp.tanh(h @ p["do_w"] + p["do_b"])
    return out.reshape(b, QUANTIZERS, LATENT_DIM), mu, logvar


# --------------------------------- main --------------------------------------
if __name__ == "__main__":
    key = jax.random.PRNGKey(0)
    k_x, k_c, k_eps, k_p = jax.random.split(key, 4)

    x = jax.random.normal(k_x, (BATCH, QUANTIZERS, LATENT_DIM), jnp.float32)
    condition = jax.random.normal(k_c, (BATCH, CONDITION_DIM), jnp.float32)
    eps = jax.random.normal(k_eps, (BATCH, INPUT_DIM), jnp.float32)

    raw = build_raw_params(k_p)
    w_slab = pack_params(raw)

    x_recon, mu, logvar = vae_forward(x, condition, eps, w_slab)
    jax.block_until_ready((x_recon, mu, logvar))

    # correctness check against pure-JAX (unfolded) reference
    r_recon, r_mu, r_logvar = vae_forward_ref(x, condition, eps, raw)
    assert x_recon.shape == (BATCH, QUANTIZERS, LATENT_DIM)
    # BN fold changes FP association slightly -> compare at 1e-4
    assert jnp.allclose(x_recon, r_recon, atol=1e-4, rtol=1e-4)
    assert jnp.allclose(mu, r_mu, atol=1e-4, rtol=1e-4)
    assert jnp.allclose(logvar, r_logvar, atol=1e-4, rtol=1e-4)

    print("KERNEL_OK")
</pallas_src>

<mosaic_0001>
module attributes {stable_mosaic.version = 11 : i64} {
  func.func @vae_fwd_kernel(%arg0: memref<8x384xf32, #tpu.memory_space<vmem>>, %arg1: memref<512x256xf32, #tpu.memory_space<vmem>>, %arg2: memref<8x384xf32, #tpu.memory_space<vmem>>) attributes {dimension_semantics = [], scalar_prefetch = 0 : i64, scratch_operands = 0 : i64, tpu.core_type = #tpu.core_type<tc>} {
    %c0 = arith.constant 0 : index
    %c0_0 = arith.constant 0 : index
    %0 = vector.load %arg0[%c0, %c0_0] : memref<8x384xf32, #tpu.memory_space<vmem>>, vector<8x128xf32>
    %c0_1 = arith.constant 0 : index
    %c128 = arith.constant 128 : index
    %1 = vector.load %arg0[%c0_1, %c128] : memref<8x384xf32, #tpu.memory_space<vmem>>, vector<8x128xf32>
    %c0_2 = arith.constant 0 : index
    %c0_3 = arith.constant 0 : index
    %2 = vector.load %arg1[%c0_2, %c0_3] : memref<512x256xf32, #tpu.memory_space<vmem>>, vector<128x64xf32>
    %cst = arith.constant dense<0.000000e+00> : vector<8x64xf32>
    %3 = tpu.matmul %0, %2, %cst {dimension_numbers = #tpu.dot_dimension_numbers<[1], [0], [0], [1], [0, 0, 1, 1], [], []>} : vector<8x128xf32>, vector<128x64xf32>, vector<8x64xf32> -> vector<8x64xf32>
    %c464 = arith.constant 464 : index
    %c0_4 = arith.constant 0 : index
    %4 = vector.load %arg1[%c464, %c0_4] : memref<512x256xf32, #tpu.memory_space<vmem>>, vector<8x64xf32>
    %5 = arith.addf %3, %4 : vector<8x64xf32>
    %cst_5 = arith.constant 2.000000e-01 : f32
    %6 = vector.broadcast %cst_5 : f32 to vector<8x64xf32>
    %7 = arith.mulf %6, %5 : vector<8x64xf32>
    %8 = arith.maximumf %5, %7 : vector<8x64xf32>
    %c128_6 = arith.constant 128 : index
    %c0_7 = arith.constant 0 : index
    %9 = vector.load %arg1[%c128_6, %c0_7] : memref<512x256xf32, #tpu.memory_space<vmem>>, vector<64x32xf32>
    %cst_8 = arith.constant dense<0.000000e+00> : vector<8x32xf32>
    %10 = tpu.matmul %8, %9, %cst_8 {dimension_numbers = #tpu.dot_dimension_numbers<[1], [0], [0], [1], [0, 0, 1, 1], [], []>} : vector<8x64xf32>, vector<64x32xf32>, vector<8x32xf32> -> vector<8x32xf32>
    %c472 = arith.constant 472 : index
    %c0_9 = arith.constant 0 : index
    %11 = vector.load %arg1[%c472, %c0_9] : memref<512x256xf32, #tpu.memory_space<vmem>>, vector<8x32xf32>
    %12 = arith.addf %10, %11 : vector<8x32xf32>
    %cst_10 = arith.constant 2.000000e-01 : f32
    %13 = vector.broadcast %cst_10 : f32 to vector<8x32xf32>
    %14 = arith.mulf %13, %12 : vector<8x32xf32>
    %15 = arith.maximumf %12, %14 : vector<8x32xf32>
    %c432 = arith.constant 432 : index
    %c0_11 = arith.constant 0 : index
    %16 = vector.load %arg1[%c432, %c0_11] : memref<512x256xf32, #tpu.memory_space<vmem>>, vector<32x256xf32>
    %cst_12 = arith.constant dense<0.000000e+00> : vector<8x256xf32>
    %17 = tpu.matmul %15, %16, %cst_12 {dimension_numbers = #tpu.dot_dimension_numbers<[1], [0], [0], [1], [0, 0, 1, 1], [], []>} : vector<8x32xf32>, vector<32x256xf32>, vector<8x256xf32> -> vector<8x256xf32>
    %c480 = arith.constant 480 : index
    %c0_13 = arith.constant 0 : index
    %18 = vector.load %arg1[%c480, %c0_13] : memref<512x256xf32, #tpu.memory_space<vmem>>, vector<8x256xf32>
    %19 = arith.addf %17, %18 : vector<8x256xf32>
    %20 = vector.extract_strided_slice %19 {offsets = [0, 0], sizes = [8, 128], strides = [1, 1]} : vector<8x256xf32> to vector<8x128xf32>
    %21 = vector.extract_strided_slice %19 {offsets = [0, 128], sizes = [8, 128], strides = [1, 1]} : vector<8x256xf32> to vector<8x128xf32>
    %cst_14 = arith.constant 5.000000e-01 : f32
    %22 = vector.broadcast %cst_14 : f32 to vector<8x128xf32>
    %23 = arith.mulf %22, %21 : vector<8x128xf32>
    %24 = math.exp %23 : vector<8x128xf32>
    %25 = arith.mulf %1, %24 : vector<8x128xf32>
    %26 = arith.addf %20, %25 : vector<8x128xf32>
    %c192 = arith.constant 192 : index
    %c0_15 = arith.constant 0 : index
    %27 = vector.load %arg1[%c192, %c0_15] : memref<512x256xf32, #tpu.memory_space<vmem>>, vector<128x32xf32>
    %cst_16 = arith.constant dense<0.000000e+00> : vector<8x32xf32>
    %28 = tpu.matmul %26, %27, %cst_16 {dimension_numbers = #tpu.dot_dimension_numbers<[1], [0], [0], [1], [0, 0, 1, 1], [], []>} : vector<8x128xf32>, vector<128x32xf32>, vector<8x32xf32> -> vector<8x32xf32>
    %c0_17 = arith.constant 0 : index
    %c256 = arith.constant 256 : index
    %29 = vector.load %arg0[%c0_17, %c256] : memref<8x384xf32, #tpu.memory_space<vmem>>, vector<8x1xf32>
    %c0_18 = arith.constant 0 : index
    %c257 = arith.constant 257 : index
    %30 = vector.load %arg0[%c0_18, %c257] : memref<8x384xf32, #tpu.memory_space<vmem>>, vector<8x1xf32>
    %c320 = arith.constant 320 : index
    %c0_19 = arith.constant 0 : index
    %31 = vector.load %arg1[%c320, %c0_19] : memref<512x256xf32, #tpu.memory_space<vmem>>, vector<8x32xf32>
    %32 = vector.broadcast %29 : vector<8x1xf32> to vector<8x32xf32>
    %33 = arith.mulf %32, %31 : vector<8x32xf32>
    %34 = arith.addf %28, %33 : vector<8x32xf32>
    %c328 = arith.constant 328 : index
    %c0_20 = arith.constant 0 : index
    %35 = vector.load %arg1[%c328, %c0_20] : memref<512x256xf32, #tpu.memory_space<vmem>>, vector<8x32xf32>
    %36 = vector.broadcast %30 : vector<8x1xf32> to vector<8x32xf32>
    %37 = arith.mulf %36, %35 : vector<8x32xf32>
    %38 = arith.addf %34, %37 : vector<8x32xf32>
    %c488 = arith.constant 488 : index
    %c0_21 = arith.constant 0 : index
    %39 = vector.load %arg1[%c488, %c0_21] : memref<512x256xf32, #tpu.memory_space<vmem>>, vector<8x32xf32>
    %40 = arith.addf %38, %39 : vector<8x32xf32>
    %cst_22 = arith.constant 2.000000e-01 : f32
    %41 = vector.broadcast %cst_22 : f32 to vector<8x32xf32>
    %42 = arith.mulf %41, %40 : vector<8x32xf32>
    %43 = arith.maximumf %40, %42 : vector<8x32xf32>
    %c336 = arith.constant 336 : index
    %c0_23 = arith.constant 0 : index
    %44 = vector.load %arg1[%c336, %c0_23] : memref<512x256xf32, #tpu.memory_space<vmem>>, vector<32x64xf32>
    %cst_24 = arith.constant dense<0.000000e+00> : vector<8x64xf32>
    %45 = tpu.matmul %43, %44, %cst_24 {dimension_numbers = #tpu.dot_dimension_numbers<[1], [0], [0], [1], [0, 0, 1, 1], [], []>} : vector<8x32xf32>, vector<32x64xf32>, vector<8x64xf32> -> vector<8x64xf32>
    %c496 = arith.constant 496 : index
    %c0_25 = arith.constant 0 : index
    %46 = vector.load %arg1[%c496, %c0_25] : memref<512x256xf32, #tpu.memory_space<vmem>>, vector<8x64xf32>
    %47 = arith.addf %45, %46 : vector<8x64xf32>
    %cst_26 = arith.constant 2.000000e-01 : f32
    %48 = vector.broadcast %cst_26 : f32 to vector<8x64xf32>
    %49 = arith.mulf %48, %47 : vector<8x64xf32>
    %50 = arith.maximumf %47, %49 : vector<8x64xf32>
    %c368 = arith.constant 368 : index
    %c0_27 = arith.constant 0 : index
    %51 = vector.load %arg1[%c368, %c0_27] : memref<512x256xf32, #tpu.memory_space<vmem>>, vector<64x128xf32>
    %cst_28 = arith.constant dense<0.000000e+00> : vector<8x128xf32>
    %52 = tpu.matmul %50, %51, %cst_28 {dimension_numbers = #tpu.dot_dimension_numbers<[1], [0], [0], [1], [0, 0, 1, 1], [], []>} : vector<8x64xf32>, vector<64x128xf32>, vector<8x128xf32> -> vector<8x128xf32>
    %c504 = arith.constant 504 : index
    %c0_29 = arith.constant 0 : index
    %53 = vector.load %arg1[%c504, %c0_29] : memref<512x256xf32, #tpu.memory_space<vmem>>, vector<8x128xf32>
    %54 = arith.addf %52, %53 : vector<8x128xf32>
    %55 = math.tanh %54 : vector<8x128xf32>
    %c0_30 = arith.constant 0 : index
    %c0_31 = arith.constant 0 : index
    %56 = vector.load %arg2[%c0_30, %c0_31] : memref<8x384xf32, #tpu.memory_space<vmem>>, vector<8x128xf32>
    tpu.vector_store %arg2[%c0_30, %c0_31], %55 {strides = array<i32>} : memref<8x384xf32, #tpu.memory_space<vmem>>, vector<8x128xf32>,
    %c0_32 = arith.constant 0 : index
    %c128_33 = arith.constant 128 : index
    %57 = vector.load %arg2[%c0_32, %c128_33] : memref<8x384xf32, #tpu.memory_space<vmem>>, vector<8x128xf32>
    tpu.vector_store %arg2[%c0_32, %c128_33], %20 {strides = array<i32>} : memref<8x384xf32, #tpu.memory_space<vmem>>, vector<8x128xf32>,
    %c0_34 = arith.constant 0 : index
    %c256_35 = arith.constant 256 : index
    %58 = vector.load %arg2[%c0_34, %c256_35] : memref<8x384xf32, #tpu.memory_space<vmem>>, vector<8x128xf32>
    tpu.vector_store %arg2[%c0_34, %c256_35], %21 {strides = array<i32>} : memref<8x384xf32, #tpu.memory_space<vmem>>, vector<8x128xf32>,
    return
  }
}

</mosaic_0001>

<llo_original>
// kernel: tpu_custom_call.1
$region0: #{tpu_custom_call.1}
  #allocation0 [shape = 'u32[]', space=smem, size = 0x4, offset = 0x4, fixed_abs, tag = 'smem constant byte address 0x4 - core index']
  #allocation1 [shape = 'u32[144,128]{1,0:T(1,128)}', space=vmem, size = 0x12000, scoped, tag = 'internal scratch']
  %s0 = inlined_call_operand.hbm [shape: f32[8,384], index: 0, kind: input, shape index: {}]
  %s1 = inlined_call_operand.hbm [shape: f32[512,256], index: 1, kind: input, shape index: {}]
  %s2 = inlined_call_operand.hbm [shape: f32[8,384], index: 2, kind: output, shape index: {}]
  %s3 = sld [smem:[#allocation0]]
  $region26: #{tpu_custom_call.1} parent=0
    _
  %s5 = ssub.s32 1, %s3
  %s6 = scalar_select 0, %s5, %s3
  $region1: #{tpu_custom_call.1} parent=0
    #allocation2 [shape = 'u8[12288]{0}', space=vmem, size = 0x3000, scoped, tag = 'input window, operand 0, single buffered']
    #allocation3 [shape = 's32[1]{0}', space=sflag, size = 0x4, scoped, tag = 'scoped memory for tpu_custom_call.1']
    #allocation4 [shape = 's32[1]{0}', space=sflag, size = 0x4, scoped, tag = 'scoped memory for tpu_custom_call.1']
    #allocation5 [shape = 'u8[524288]{0}', space=vmem, size = 0x80000, scoped, tag = 'input window, operand 1, single buffered']
    #allocation6 [shape = 's32[1]{0}', space=sflag, size = 0x4, scoped, tag = 'scoped memory for tpu_custom_call.1']
    #allocation7 [shape = 'u8[12288]{0}', space=vmem, size = 0x3000, scoped, tag = 'output window, operand 0, single buffered']
    %7 = vsyncpa [#allocation3], 0
    %8 = vsyncpa [#allocation6], 0
    %9 = vsyncpa [#allocation4], 0
    // Predicated region
    $region2: #{tpu_custom_call.1} parent=1 // pred_check
      _
    $region3: #{tpu_custom_call.1} parent=1 // pred_check_branch
      %11 = sbr.rel (0) target = $region5
    $region4: #{tpu_custom_call.1} parent=1 // pred_region
      %s13 = ssub.s32 384, 384
      %14 = vsyncadd [#allocation3], %s13
      %s16 = sshll.u32 [#allocation2], 4
      %s17 = int_to_ptr.vmem [resolvable:$true] %s16
      %19 = dma.hbm_to_vmem [thread:$0]  %s0, 384, %s17, [#allocation3]
    $region5: #{tpu_custom_call.1} parent=1 // pred_fallthru
      _
    // Predicated region
    $region6: #{tpu_custom_call.1} parent=1 // pred_check
      _
    $region7: #{tpu_custom_call.1} parent=1 // pred_check_branch
      %21 = sbr.rel (0) target = $region9
    $region8: #{tpu_custom_call.1} parent=1 // pred_region
      %s23 = ssub.s32 16384, 16384
      %24 = vsyncadd [#allocation6], %s23
      %s25 = sshll.u32 [#allocation5], 4
      %s26 = int_to_ptr.vmem [resolvable:$true] %s25
      %31 = dma.hbm_to_vmem [thread:$0]  %s1, 16384, %s26, [#allocation6], 256, 256, 16
    $region9: #{tpu_custom_call.1} parent=1 // pred_fallthru
      _
    // Predicated region
    $region10: #{tpu_custom_call.1} parent=1 // pred_check
      _
    $region11: #{tpu_custom_call.1} parent=1 // pred_check_branch
      %33 = sbr.rel (0) target = $region13
    $region12: #{tpu_custom_call.1} parent=1 // pred_region
      %34 = dma.done [#allocation3], 384
    $region13: #{tpu_custom_call.1} parent=1 // pred_fallthru
      _
    // Predicated region
    $region14: #{tpu_custom_call.1} parent=1 // pred_check
      _
    $region15: #{tpu_custom_call.1} parent=1 // pred_check_branch
      %36 = sbr.rel (0) target = $region17
    $region16: #{tpu_custom_call.1} parent=1 // pred_region
      %37 = dma.done [#allocation6], 16384
    $region17: #{tpu_custom_call.1} parent=1 // pred_fallthru
      _
    %v38 = vld [vmem:[#allocation2] sm:$0xff]
    %v39 = vld [vmem:[#allocation2 + $0x8] sm:$0xff]
    %v40 = vld [vmem:[#allocation5] sm:$0xff]
    %v41 = vld [vmem:[#allocation5 + $0x10] sm:$0xff]
    %v42 = vld [vmem:[#allocation5 + $0x20] sm:$0xff]
    %v43 = vld [vmem:[#allocation5 + $0x30] sm:$0xff]
    %v44 = vld [vmem:[#allocation5 + $0x40] sm:$0xff]
    %v45 = vld [vmem:[#allocation5 + $0x50] sm:$0xff]
    %v46 = vld [vmem:[#allocation5 + $0x60] sm:$0xff]
    %v47 = vld [vmem:[#allocation5 + $0x70] sm:$0xff]
    %v48 = vld [vmem:[#allocation5 + $0x80] sm:$0xff]
    %v49 = vld [vmem:[#allocation5 + $0x90] sm:$0xff]
    %v50 = vld [vmem:[#allocation5 + $0xa0] sm:$0xff]
    %v51 = vld [vmem:[#allocation5 + $0xb0] sm:$0xff]
    %v52 = vld [vmem:[#allocation5 + $0xc0] sm:$0xff]
    %v53 = vld [vmem:[#allocation5 + $0xd0] sm:$0xff]
    %v54 = vld [vmem:[#allocation5 + $0xe0] sm:$0xff]
    %v55 = vld [vmem:[#allocation5 + $0xf0] sm:$0xff]
    %v56 = vld [vmem:[#allocation5 + $0x3a0] sm:$0xff]
    %57 = vmatprep.subr.mxu0 0.0
    %58 = vmatpush1.msra.mxu0 %v55
    %59 = vmatprep.subr.mxu0 0.0
    %60 = vmatpush1.msra.mxu0 %v54
    %61 = vmatprep.subr.mxu0 0.0
    %62 = vmatpush1.msra.mxu0 %v53
    %63 = vmatprep.subr.mxu0 0.0
    %64 = vmatpush1.msra.mxu0 %v52
    %65 = vmatprep.subr.mxu0 0.0
    %66 = vmatpush1.msra.mxu0 %v51
    %67 = vmatprep.subr.mxu0 0.0
    %68 = vmatpush1.msra.mxu0 %v50
    %69 = vmatprep.subr.mxu0 0.0
    %70 = vmatpush1.msra.mxu0 %v49
    %71 = vmatprep.subr.mxu0 0.0
    %72 = vmatpush1.msra.mxu0 %v48
    %73 = vmatprep.subr.mxu0 0.0
    %74 = vmatpush1.msra.mxu0 %v47
    %75 = vmatprep.subr.mxu0 0.0
    %76 = vmatpush1.msra.mxu0 %v46
    %77 = vmatprep.subr.mxu0 0.0
    %78 = vmatpush1.msra.mxu0 %v45
    %79 = vmatprep.subr.mxu0 0.0
    %80 = vmatpush1.msra.mxu0 %v44
    %81 = vmatprep.subr.mxu0 0.0
    %82 = vmatpush1.msra.mxu0 %v43
    %83 = vmatprep.subr.mxu0 0.0
    %84 = vmatpush1.msra.mxu0 %v42
    %85 = vmatprep.subr.mxu0 0.0
    %86 = vmatpush1.msra.mxu0 %v41
    %87 = vmatprep.subr.mxu0 0.0
    %88 = vmatpush1.msra.mxu0 %v40
    %89 = vmatprep.subr.mxu0 0.0
    %90 = vmatpush2.msra.mxu0 0.0
    %91 = vmatprep.subr.mxu0 0.0
    %92 = vmatpush2.msra.mxu0 0.0
    %93 = vmatprep.subr.mxu0 0.0
    %94 = vmatpush2.msra.mxu0 0.0
    %95 = vmatprep.subr.mxu0 0.0
    %96 = vmatpush2.msra.mxu0 0.0
    %97 = vmatprep.subr.mxu0 0.0
    %98 = vmatpush2.msra.mxu0 0.0
    %99 = vmatprep.subr.mxu0 0.0
    %100 = vmatpush2.msra.mxu0 0.0
    %101 = vmatprep.subr.mxu0 0.0
    %102 = vmatpush2.msra.mxu0 0.0
    %103 = vmatprep.subr.mxu0 0.0
    %104 = vmatpush2.msra.mxu0 0.0
    %105 = vmatprep.subr.mxu0 0.0
    %106 = vmatpush2.msra.mxu0 0.0
    %107 = vmatprep.subr.mxu0 0.0
    %108 = vmatpush2.msra.mxu0 0.0
    %109 = vmatprep.subr.mxu0 0.0
    %110 = vmatpush2.msra.mxu0 0.0
    %111 = vmatprep.subr.mxu0 0.0
    %112 = vmatpush2.msra.mxu0 0.0
    %113 = vmatprep.subr.mxu0 0.0
    %114 = vmatpush2.msra.mxu0 0.0
    %115 = vmatprep.subr.mxu0 0.0
    %116 = vmatpush2.msra.mxu0 0.0
    %117 = vmatprep.subr.mxu0 0.0
    %118 = vmatpush2.msra.mxu0 0.0
    %119 = vmatprep.subr.mxu0 0.0
    %120 = vmatpush2.msra.mxu0 0.0
    %121 = vmatprep.mubr.f32.mxu0 0.0
    %122 = vmatmul.mubr.f32.gmra.mxu0 %v38
    %v123 = vpop.f32.mrf.mxu0
    %v124 = vadd.f32 %v56, %v123
    %v125 = vpop.f32.mrf.mxu0
    %126 = vdwg.mxu0
    %v127 = vmul.f32 %v124, 0.2
    %v128 = vmax.f32 %v124, %v127
    %v129 = vld [vmem:[#allocation5 + $0x100] sm:$0xff]
    %v130 = vld [vmem:[#allocation5 + $0x110] sm:$0xff]
    %v131 = vld [vmem:[#allocation5 + $0x120] sm:$0xff]
    %v132 = vld [vmem:[#allocation5 + $0x130] sm:$0xff]
    %v133 = vld [vmem:[#allocation5 + $0x140] sm:$0xff]
    %v134 = vld [vmem:[#allocation5 + $0x150] sm:$0xff]
    %v135 = vld [vmem:[#allocation5 + $0x160] sm:$0xff]
    %v136 = vld [vmem:[#allocation5 + $0x170] sm:$0xff]
    %v137 = vld [vmem:[#allocation5 + $0x3b0] sm:$0xff]
    %vm138 = vcmask 523264
    %v140 = vsel %vm138, %v128, 0
    %142 = vmatprep.subr.mxu0 0.0
    %143 = vmatpush1.msra.mxu0 0.0
    %144 = vmatprep.subr.mxu0 0.0
    %145 = vmatpush1.msra.mxu0 0.0
    %146 = vmatprep.subr.mxu0 0.0
    %147 = vmatpush1.msra.mxu0 0.0
    %148 = vmatprep.subr.mxu0 0.0
    %149 = vmatpush1.msra.mxu0 0.0
    %150 = vmatprep.subr.mxu0 0.0
    %151 = vmatpush1.msra.mxu0 0.0
    %152 = vmatprep.subr.mxu0 0.0
    %153 = vmatpush1.msra.mxu0 0.0
    %154 = vmatprep.subr.mxu0 0.0
    %155 = vmatpush1.msra.mxu0 0.0
    %156 = vmatprep.subr.mxu0 0.0
    %157 = vmatpush1.msra.mxu0 0.0
    %158 = vmatprep.subr.mxu0 0.0
    %159 = vmatpush1.msra.mxu0 %v136
    %160 = vmatprep.subr.mxu0 0.0
    %161 = vmatpush1.msra.mxu0 %v135
    %162 = vmatprep.subr.mxu0 0.0
    %163 = vmatpush1.msra.mxu0 %v134
    %164 = vmatprep.subr.mxu0 0.0
    %165 = vmatpush1.msra.mxu0 %v133
    %166 = vmatprep.subr.mxu0 0.0
    %167 = vmatpush1.msra.mxu0 %v132
    %168 = vmatprep.subr.mxu0 0.0
    %169 = vmatpush1.msra.mxu0 %v131
    %170 = vmatprep.subr.mxu0 0.0
    %171 = vmatpush1.msra.mxu0 %v130
    %172 = vmatprep.subr.mxu0 0.0
    %173 = vmatpush1.msra.mxu0 %v129
    %174 = vmatprep.subr.mxu0 0.0
    %175 = vmatpush2.msra.mxu0 0.0
    %176 = vmatprep.subr.mxu0 0.0
    %177 = vmatpush2.msra.mxu0 0.0
    %178 = vmatprep.subr.mxu0 0.0
    %179 = vmatpush2.msra.mxu0 0.0
    %180 = vmatprep.subr.mxu0 0.0
    %181 = vmatpush2.msra.mxu0 0.0
    %182 = vmatprep.subr.mxu0 0.0
    %183 = vmatpush2.msra.mxu0 0.0
    %184 = vmatprep.subr.mxu0 0.0
    %185 = vmatpush2.msra.mxu0 0.0
    %186 = vmatprep.subr.mxu0 0.0
    %187 = vmatpush2.msra.mxu0 0.0
    %188 = vmatprep.subr.mxu0 0.0
    %189 = vmatpush2.msra.mxu0 0.0
    %190 = vmatprep.subr.mxu0 0.0
    %191 = vmatpush2.msra.mxu0 0.0
    %192 = vmatprep.subr.mxu0 0.0
    %193 = vmatpush2.msra.mxu0 0.0
    %194 = vmatprep.subr.mxu0 0.0
    %195 = vmatpush2.msra.mxu0 0.0
    %196 = vmatprep.subr.mxu0 0.0
    %197 = vmatpush2.msra.mxu0 0.0
    %198 = vmatprep.subr.mxu0 0.0
    %199 = vmatpush2.msra.mxu0 0.0
    %200 = vmatprep.subr.mxu0 0.0
    %201 = vmatpush2.msra.mxu0 0.0
    %202 = vmatprep.subr.mxu0 0.0
    %203 = vmatpush2.msra.mxu0 0.0
    %204 = vmatprep.subr.mxu0 0.0
    %205 = vmatpush2.msra.mxu0 0.0
    %206 = vmatprep.mubr.f32.mxu0 0.0
    %207 = vmatmul.mubr.f32.gmra.mxu0 %v140
    %v208 = vpop.f32.mrf.mxu0
    %v209 = vadd.f32 %v137, %v208
    %v210 = vpop.f32.mrf.mxu0
    %211 = vdwg.mxu0
    %v212 = vmul.f32 %v209, 0.2
    %v213 = vmax.f32 %v209, %v212
    %v214 = vld [vmem:[#allocation5 + $0x360] sm:$0xff]
    %v215 = vld [vmem:[#allocation5 + $0x368] sm:$0xff]
    %v216 = vld [vmem:[#allocation5 + $0x370] sm:$0xff]
    %v217 = vld [vmem:[#allocation5 + $0x378] sm:$0xff]
    %v218 = vld [vmem:[#allocation5 + $0x380] sm:$0xff]
    %v219 = vld [vmem:[#allocation5 + $0x388] sm:$0xff]
    %v220 = vld [vmem:[#allocation5 + $0x390] sm:$0xff]
    %v221 = vld [vmem:[#allocation5 + $0x398] sm:$0xff]
    %v222 = vld [vmem:[#allocation5 + $0x3c0] sm:$0xff]
    %v223 = vld [vmem:[#allocation5 + $0x3c8] sm:$0xff]
    %vm224 = vcmask 261120
    %v226 = vsel %vm224, %v213, 0
    %228 = vmatprep.subr.mxu0 0.0
    %229 = vmatpush1.msra.mxu0 0.0
    %230 = vmatprep.subr.mxu0 0.0
    %231 = vmatpush1.msra.mxu0 0.0
    %232 = vmatprep.subr.mxu0 0.0
    %233 = vmatpush1.msra.mxu0 0.0
    %234 = vmatprep.subr.mxu0 0.0
    %235 = vmatpush1.msra.mxu0 0.0
    %236 = vmatprep.subr.mxu0 0.0
    %237 = vmatpush1.msra.mxu0 0.0
    %238 = vmatprep.subr.mxu0 0.0
    %239 = vmatpush1.msra.mxu0 0.0
    %240 = vmatprep.subr.mxu0 0.0
    %241 = vmatpush1.msra.mxu0 0.0
    %242 = vmatprep.subr.mxu0 0.0
    %243 = vmatpush1.msra.mxu0 0.0
    %244 = vmatprep.subr.mxu0 0.0
    %245 = vmatpush1.msra.mxu0 0.0
    %246 = vmatprep.subr.mxu0 0.0
    %247 = vmatpush1.msra.mxu0 0.0
    %248 = vmatprep.subr.mxu0 0.0
    %249 = vmatpush1.msra.mxu0 0.0
    %250 = vmatprep.subr.mxu0 0.0
    %251 = vmatpush1.msra.mxu0 0.0
    %252 = vmatprep.subr.mxu0 %v221
    %253 = vmatpush1.msra.mxu0 %v220
    %254 = vmatprep.subr.mxu0 %v219
    %255 = vmatpush1.msra.mxu0 %v218
    %256 = vmatprep.subr.mxu0 %v217
    %257 = vmatpush1.msra.mxu0 %v216
    %258 = vmatprep.subr.mxu0 %v215
    %259 = vmatpush1.msra.mxu0 %v214
    %260 = vmatprep.subr.mxu0 0.0
    %261 = vmatpush2.msra.mxu0 0.0
    %262 = vmatprep.subr.mxu0 0.0
    %263 = vmatpush2.msra.mxu0 0.0
    %264 = vmatprep.subr.mxu0 0.0
    %265 = vmatpush2.msra.mxu0 0.0
    %266 = vmatprep.subr.mxu0 0.0
    %267 = vmatpush2.msra.mxu0 0.0
    %268 = vmatprep.subr.mxu0 0.0
    %269 = vmatpush2.msra.mxu0 0.0
    %270 = vmatprep.subr.mxu0 0.0
    %271 = vmatpush2.msra.mxu0 0.0
    %272 = vmatprep.subr.mxu0 0.0
    %273 = vmatpush2.msra.mxu0 0.0
    %274 = vmatprep.subr.mxu0 0.0
    %275 = vmatpush2.msra.mxu0 0.0
    %276 = vmatprep.subr.mxu0 0.0
    %277 = vmatpush2.msra.mxu0 0.0
    %278 = vmatprep.subr.mxu0 0.0
    %279 = vmatpush2.msra.mxu0 0.0
    %280 = vmatprep.subr.mxu0 0.0
    %281 = vmatpush2.msra.mxu0 0.0
    %282 = vmatprep.subr.mxu0 0.0
    %283 = vmatpush2.msra.mxu0 0.0
    %284 = vmatprep.subr.mxu0 0.0
    %285 = vmatpush2.msra.mxu0 0.0
    %286 = vmatprep.subr.mxu0 0.0
    %287 = vmatpush2.msra.mxu0 0.0
    %288 = vmatprep.subr.mxu0 0.0
    %289 = vmatpush2.msra.mxu0 0.0
    %290 = vmatprep.subr.mxu0 0.0
    %291 = vmatpush2.msra.mxu0 0.0
    %292 = vmatprep.mubr.f32.mxu0 0.0
    %293 = vmatmul.mubr.f32.gmra.mxu0 %v226
    %v294 = vpop.f32.mrf.mxu0
    %v295 = vadd.f32 %v222, %v294
    %v296 = vpop.f32.mrf.mxu0
    %v297 = vadd.f32 %v223, %v296
    %298 = vdwg.mxu0
    %v299 = vmul.f32 %v297, 0.5
    %v300 = vmul.f32 %v299, 1.442695
    %v301 = vpow.pop %v300
    %v302 = vmul.f32 %v39, %v301
    %v303 = vadd.f32 %v295, %v302
    %v304 = vld [vmem:[#allocation5 + $0x180] sm:$0xff]
    %v305 = vld [vmem:[#allocation5 + $0x190] sm:$0xff]
    %v306 = vld [vmem:[#allocation5 + $0x1a0] sm:$0xff]
    %v307 = vld [vmem:[#allocation5 + $0x1b0] sm:$0xff]
    %v308 = vld [vmem:[#allocation5 + $0x1c0] sm:$0xff]
    %v309 = vld [vmem:[#allocation5 + $0x1d0] sm:$0xff]
    %v310 = vld [vmem:[#allocation5 + $0x1e0] sm:$0xff]
    %v311 = vld [vmem:[#allocation5 + $0x1f0] sm:$0xff]
    %v312 = vld [vmem:[#allocation5 + $0x200] sm:$0xff]
    %v313 = vld [vmem:[#allocation5 + $0x210] sm:$0xff]
    %v314 = vld [vmem:[#allocation5 + $0x220] sm:$0xff]
    %v315 = vld [vmem:[#allocation5 + $0x230] sm:$0xff]
    %v316 = vld [vmem:[#allocation5 + $0x240] sm:$0xff]
    %v317 = vld [vmem:[#allocation5 + $0x250] sm:$0xff]
    %v318 = vld [vmem:[#allocation5 + $0x260] sm:$0xff]
    %v319 = vld [vmem:[#allocation5 + $0x270] sm:$0xff]
    %v320 = vld [vmem:[#allocation2 + $0x10] sm:$0xff]
    %v321 = vld [vmem:[#allocation5 + $0x280] sm:$0xff]
    %323 = vset.pattern.permute.xlu0 0
    %324 = vperm.xlu0 %323, %v320
    %v325 = vpop.permute.xlu0 %324
    %v327 = vmul.f32 %v325, %v321
    %328 = vmatprep.subr.mxu0 0.0
    %329 = vmatpush1.msra.mxu0 %v319
    %330 = vmatprep.subr.mxu0 0.0
    %331 = vmatpush1.msra.mxu0 %v318
    %332 = vmatprep.subr.mxu0 0.0
    %333 = vmatpush1.msra.mxu0 %v317
    %334 = vmatprep.subr.mxu0 0.0
    %335 = vmatpush1.msra.mxu0 %v316
    %336 = vmatprep.subr.mxu0 0.0
    %337 = vmatpush1.msra.mxu0 %v315
    %338 = vmatprep.subr.mxu0 0.0
    %339 = vmatpush1.msra.mxu0 %v314
    %340 = vmatprep.subr.mxu0 0.0
    %341 = vmatpush1.msra.mxu0 %v313
    %342 = vmatprep.subr.mxu0 0.0
    %343 = vmatpush1.msra.mxu0 %v312
    %344 = vmatprep.subr.mxu0 0.0
    %345 = vmatpush1.msra.mxu0 %v311
    %346 = vmatprep.subr.mxu0 0.0
    %347 = vmatpush1.msra.mxu0 %v310
    %348 = vmatprep.subr.mxu0 0.0
    %349 = vmatpush1.msra.mxu0 %v309
    %350 = vmatprep.subr.mxu0 0.0
    %351 = vmatpush1.msra.mxu0 %v308
    %352 = vmatprep.subr.mxu0 0.0
    %353 = vmatpush1.msra.mxu0 %v307
    %354 = vmatprep.subr.mxu0 0.0
    %355 = vmatpush1.msra.mxu0 %v306
    %356 = vmatprep.subr.mxu0 0.0
    %357 = vmatpush1.msra.mxu0 %v305
    %358 = vmatprep.subr.mxu0 0.0
    %359 = vmatpush1.msra.mxu0 %v304
    %360 = vmatprep.subr.mxu0 0.0
    %361 = vmatpush2.msra.mxu0 0.0
    %362 = vmatprep.subr.mxu0 0.0
    %363 = vmatpush2.msra.mxu0 0.0
    %364 = vmatprep.subr.mxu0 0.0
    %365 = vmatpush2.msra.mxu0 0.0
    %366 = vmatprep.subr.mxu0 0.0
    %367 = vmatpush2.msra.mxu0 0.0
    %368 = vmatprep.subr.mxu0 0.0
    %369 = vmatpush2.msra.mxu0 0.0
    %370 = vmatprep.subr.mxu0 0.0
    %371 = vmatpush2.msra.mxu0 0.0
    %372 = vmatprep.subr.mxu0 0.0
    %373 = vmatpush2.msra.mxu0 0.0
    %374 = vmatprep.subr.mxu0 0.0
    %375 = vmatpush2.msra.mxu0 0.0
    %376 = vmatprep.subr.mxu0 0.0
    %377 = vmatpush2.msra.mxu0 0.0
    %378 = vmatprep.subr.mxu0 0.0
    %379 = vmatpush2.msra.mxu0 0.0
    %380 = vmatprep.subr.mxu0 0.0
    %381 = vmatpush2.msra.mxu0 0.0
    %382 = vmatprep.subr.mxu0 0.0
    %383 = vmatpush2.msra.mxu0 0.0
    %384 = vmatprep.subr.mxu0 0.0
    %385 = vmatpush2.msra.mxu0 0.0
    %386 = vmatprep.subr.mxu0 0.0
    %387 = vmatpush2.msra.mxu0 0.0
    %388 = vmatprep.subr.mxu0 0.0
    %389 = vmatpush2.msra.mxu0 0.0
    %390 = vmatprep.subr.mxu0 0.0
    %391 = vmatpush2.msra.mxu0 0.0
    %392 = vmatprep.mubr.f32.mxu0 0.0
    %393 = vmatmul.mubr.f32.gmra.mxu0 %v303
    %v394 = vpop.f32.mrf.mxu0
    %v395 = vadd.f32 %v327, %v394
    %v396 = vpop.f32.mrf.mxu0
    %397 = vdwg.mxu0
    %v398 = vld [vmem:[#allocation5 + $0x290] sm:$0xff]
    %399 = vset.pattern.permute.xlu0 1
    %400 = vperm.xlu0 %399, %v320
    %v401 = vpop.permute.xlu0 %400
    %v403 = vmul.f32 %v401, %v398
    %v404 = vadd.f32 %v395, %v403
    %v405 = vld [vmem:[#allocation5 + $0x3d0] sm:$0xff]
    %v406 = vadd.f32 %v404, %v405
    %v407 = vmul.f32 %v406, 0.2
    %v408 = vmax.f32 %v406, %v407
    %v409 = vld [vmem:[#allocation5 + $0x2a0] sm:$0xff]
    %v410 = vld [vmem:[#allocation5 + $0x2b0] sm:$0xff]
    %v411 = vld [vmem:[#allocation5 + $0x2c0] sm:$0xff]
    %v412 = vld [vmem:[#allocation5 + $0x2d0] sm:$0xff]
    %v413 = vld [vmem:[#allocation5 + $0x3e0] sm:$0xff]
    %v415 = vsel %vm224, %v408, 0
    %417 = vmatprep.subr.mxu0 0.0
    %418 = vmatpush1.msra.mxu0 0.0
    %419 = vmatprep.subr.mxu0 0.0
    %420 = vmatpush1.msra.mxu0 0.0
    %421 = vmatprep.subr.mxu0 0.0
    %422 = vmatpush1.msra.mxu0 0.0
    %423 = vmatprep.subr.mxu0 0.0
    %424 = vmatpush1.msra.mxu0 0.0
    %425 = vmatprep.subr.mxu0 0.0
    %426 = vmatpush1.msra.mxu0 0.0
    %427 = vmatprep.subr.mxu0 0.0
    %428 = vmatpush1.msra.mxu0 0.0
    %429 = vmatprep.subr.mxu0 0.0
    %430 = vmatpush1.msra.mxu0 0.0
    %431 = vmatprep.subr.mxu0 0.0
    %432 = vmatpush1.msra.mxu0 0.0
    %433 = vmatprep.subr.mxu0 0.0
    %434 = vmatpush1.msra.mxu0 0.0
    %435 = vmatprep.subr.mxu0 0.0
    %436 = vmatpush1.msra.mxu0 0.0
    %437 = vmatprep.subr.mxu0 0.0
    %438 = vmatpush1.msra.mxu0 0.0
    %439 = vmatprep.subr.mxu0 0.0
    %440 = vmatpush1.msra.mxu0 0.0
    %441 = vmatprep.subr.mxu0 0.0
    %442 = vmatpush1.msra.mxu0 %v412
    %443 = vmatprep.subr.mxu0 0.0
    %444 = vmatpush1.msra.mxu0 %v411
    %445 = vmatprep.subr.mxu0 0.0
    %446 = vmatpush1.msra.mxu0 %v410
    %447 = vmatprep.subr.mxu0 0.0
    %448 = vmatpush1.msra.mxu0 %v409
    %449 = vmatprep.subr.mxu0 0.0
    %450 = vmatpush2.msra.mxu0 0.0
    %451 = vmatprep.subr.mxu0 0.0
    %452 = vmatpush2.msra.mxu0 0.0
    %453 = vmatprep.subr.mxu0 0.0
    %454 = vmatpush2.msra.mxu0 0.0
    %455 = vmatprep.subr.mxu0 0.0
    %456 = vmatpush2.msra.mxu0 0.0
    %457 = vmatprep.subr.mxu0 0.0
    %458 = vmatpush2.msra.mxu0 0.0
    %459 = vmatprep.subr.mxu0 0.0
    %460 = vmatpush2.msra.mxu0 0.0
    %461 = vmatprep.subr.mxu0 0.0
    %462 = vmatpush2.msra.mxu0 0.0
    %463 = vmatprep.subr.mxu0 0.0
    %464 = vmatpush2.msra.mxu0 0.0
    %465 = vmatprep.subr.mxu0 0.0
    %466 = vmatpush2.msra.mxu0 0.0
    %467 = vmatprep.subr.mxu0 0.0
    %468 = vmatpush2.msra.mxu0 0.0
    %469 = vmatprep.subr.mxu0 0.0
    %470 = vmatpush2.msra.mxu0 0.0
    %471 = vmatprep.subr.mxu0 0.0
    %472 = vmatpush2.msra.mxu0 0.0
    %473 = vmatprep.subr.mxu0 0.0
    %474 = vmatpush2.msra.mxu0 0.0
    %475 = vmatprep.subr.mxu0 0.0
    %476 = vmatpush2.msra.mxu0 0.0
    %477 = vmatprep.subr.mxu0 0.0
    %478 = vmatpush2.msra.mxu0 0.0
    %479 = vmatprep.subr.mxu0 0.0
    %480 = vmatpush2.msra.mxu0 0.0
    %481 = vmatprep.mubr.f32.mxu0 0.0
    %482 = vmatmul.mubr.f32.gmra.mxu0 %v415
    %v483 = vpop.f32.mrf.mxu0
    %v484 = vadd.f32 %v413, %v483
    %v485 = vpop.f32.mrf.mxu0
    %486 = vdwg.mxu0
    %v487 = vmul.f32 %v484, 0.2
    %v488 = vmax.f32 %v484, %v487
    %v489 = vld [vmem:[#allocation5 + $0x2e0] sm:$0xff]
    %v490 = vld [vmem:[#allocation5 + $0x2f0] sm:$0xff]
    %v491 = vld [vmem:[#allocation5 + $0x300] sm:$0xff]
    %v492 = vld [vmem:[#allocation5 + $0x310] sm:$0xff]
    %v493 = vld [vmem:[#allocation5 + $0x320] sm:$0xff]
    %v494 = vld [vmem:[#allocation5 + $0x330] sm:$0xff]
    %v495 = vld [vmem:[#allocation5 + $0x340] sm:$0xff]
    %v496 = vld [vmem:[#allocation5 + $0x350] sm:$0xff]
    %v497 = vld [vmem:[#allocation5 + $0x3f0] sm:$0xff]
    %v499 = vsel %vm138, %v488, 0
    %501 = vmatprep.subr.mxu0 0.0
    %502 = vmatpush1.msra.mxu0 0.0
    %503 = vmatprep.subr.mxu0 0.0
    %504 = vmatpush1.msra.mxu0 0.0
    %505 = vmatprep.subr.mxu0 0.0
    %506 = vmatpush1.msra.mxu0 0.0
    %507 = vmatprep.subr.mxu0 0.0
    %508 = vmatpush1.msra.mxu0 0.0
    %509 = vmatprep.subr.mxu0 0.0
    %510 = vmatpush1.msra.mxu0 0.0
    %511 = vmatprep.subr.mxu0 0.0
    %512 = vmatpush1.msra.mxu0 0.0
    %513 = vmatprep.subr.mxu0 0.0
    %514 = vmatpush1.msra.mxu0 0.0
    %515 = vmatprep.subr.mxu0 0.0
    %516 = vmatpush1.msra.mxu0 0.0
    %517 = vmatprep.subr.mxu0 0.0
    %518 = vmatpush1.msra.mxu0 %v496
    %519 = vmatprep.subr.mxu0 0.0
    %520 = vmatpush1.msra.mxu0 %v495
    %521 = vmatprep.subr.mxu0 0.0
    %522 = vmatpush1.msra.mxu0 %v494
    %523 = vmatprep.subr.mxu0 0.0
    %524 = vmatpush1.msra.mxu0 %v493
    %525 = vmatprep.subr.mxu0 0.0
    %526 = vmatpush1.msra.mxu0 %v492
    %527 = vmatprep.subr.mxu0 0.0
    %528 = vmatpush1.msra.mxu0 %v491
    %529 = vmatprep.subr.mxu0 0.0
    %530 = vmatpush1.msra.mxu0 %v490
    %531 = vmatprep.subr.mxu0 0.0
    %532 = vmatpush1.msra.mxu0 %v489
    %533 = vmatprep.subr.mxu0 0.0
    %534 = vmatpush2.msra.mxu0 0.0
    %535 = vmatprep.subr.mxu0 0.0
    %536 = vmatpush2.msra.mxu0 0.0
    %537 = vmatprep.subr.mxu0 0.0
    %538 = vmatpush2.msra.mxu0 0.0
    %539 = vmatprep.subr.mxu0 0.0
    %540 = vmatpush2.msra.mxu0 0.0
    %541 = vmatprep.subr.mxu0 0.0
    %542 = vmatpush2.msra.mxu0 0.0
    %543 = vmatprep.subr.mxu0 0.0
    %544 = vmatpush2.msra.mxu0 0.0
    %545 = vmatprep.subr.mxu0 0.0
    %546 = vmatpush2.msra.mxu0 0.0
    %547 = vmatprep.subr.mxu0 0.0
    %548 = vmatpush2.msra.mxu0 0.0
    %549 = vmatprep.subr.mxu0 0.0
    %550 = vmatpush2.msra.mxu0 0.0
    %551 = vmatprep.subr.mxu0 0.0
    %552 = vmatpush2.msra.mxu0 0.0
    %553 = vmatprep.subr.mxu0 0.0
    %554 = vmatpush2.msra.mxu0 0.0
    %555 = vmatprep.subr.mxu0 0.0
    %556 = vmatpush2.msra.mxu0 0.0
    %557 = vmatprep.subr.mxu0 0.0
    %558 = vmatpush2.msra.mxu0 0.0
    %559 = vmatprep.subr.mxu0 0.0
    %560 = vmatpush2.msra.mxu0 0.0
    %561 = vmatprep.subr.mxu0 0.0
    %562 = vmatpush2.msra.mxu0 0.0
    %563 = vmatprep.subr.mxu0 0.0
    %564 = vmatpush2.msra.mxu0 0.0
    %565 = vmatprep.mubr.f32.mxu0 0.0
    %566 = vmatmul.mubr.f32.gmra.mxu0 %v499
    %v567 = vpop.f32.mrf.mxu0
    %v568 = vadd.f32 %v497, %v567
    %v569 = vpop.f32.mrf.mxu0
    %570 = vdwg.mxu0
    %v571 = vtanh.pop %v568
    %572 = vst [vmem:[#allocation7] sm:$0xff] %v571
    %573 = vst [vmem:[#allocation7 + $0x8] sm:$0xff] %v295
    %574 = vst [vmem:[#allocation7 + $0x10] sm:$0xff] %v297
    // Predicated region
    $region18: #{tpu_custom_call.1} parent=1 // pred_check
      _
    $region19: #{tpu_custom_call.1} parent=1 // pred_check_branch
      %576 = sbr.rel (0) target = $region21
    $region20: #{tpu_custom_call.1} parent=1 // pred_region
      %s578 = ssub.s32 384, 384
      %579 = vsyncadd [#allocation4], %s578
      %s581 = sshll.u32 [#allocation7], 4
      %s582 = int_to_ptr.vmem [resolvable:$true] %s581
      %584 = dma.vmem_to_hbm [thread:$0]  %s582, 384, %s2, [#allocation4]
    $region21: #{tpu_custom_call.1} parent=1 // pred_fallthru
      _
    // Predicated region
    $region22: #{tpu_custom_call.1} parent=1 // pred_check
      _
    $region23: #{tpu_custom_call.1} parent=1 // pred_check_branch
      %586 = sbr.rel (0) target = $region25
    $region24: #{tpu_custom_call.1} parent=1 // pred_region
      %587 = dma.done [#allocation4], 384
    $region25: #{tpu_custom_call.1} parent=1 // pred_fallthru
      _
    %588 = vsyncpa [#allocation3], 1
    %589 = vsyncpa [#allocation6], 1
    %590 = vsyncpa [#allocation4], 1

</llo_original>
